<compile_context>
chip_gen: v7x
topology: tpu7x:2x2x1
jax: 0.10.0
libtpu: 0.0.40
codegen_flags: <defaults>
</compile_context>

<pallas_src>
import functools

import jax
import jax.numpy as jnp
from jax.experimental import pallas as pl
from jax.experimental.pallas import tpu as pltpu


def _dice_partial_kernel(xT_ref, t_ref, out_ref, *, smooth, alpha,
                         square_denominator, with_logits, n_total, tile_rows,
                         ragged):
    """Per-tile, per-class partial sums.

    xT_ref : (C, TILE)  logits, class-major (rows on the 128-lane axis)
    t_ref  : (1, TILE)  integer class ids (any int dtype; upcast here)
    out_ref: (1, C, 3)  [:,:,0] = sum_i p*y  (square_denominator=True: sum of
                                  the full per-element ratio terms)
                        [:,:,1] = sum_i p
                        [:,:,2] = sum_i y
    """
    x = xT_ref[...].astype(jnp.float32)                       # (C, TILE)
    c, tn = x.shape
    t = t_ref[...].astype(jnp.int32)                          # (1, TILE)

    if ragged:
        # Only compiled in when N % tile != 0 (last tile has padded columns
        # whose contents are undefined).
        col = (jax.lax.broadcasted_iota(jnp.int32, (1, tn), 1)
               + pl.program_id(0) * tile_rows)
        valid = col < n_total                                  # (1, TILE)
        x = jnp.where(valid, x, 0.0)                           # sanitize pre-exp
        t = jnp.where(valid, t, c)                             # -> all-zero one-hot

    if with_logits:
        m = jnp.max(x, axis=0, keepdims=True)                  # (1, TILE)
        e = jnp.exp(x - m)
        s = jnp.sum(e, axis=0, keepdims=True)                  # (1, TILE)
        r = pl.reciprocal(s, approx=True)                      # EUP slot, cheap
        r = r * (2.0 - s * r)                                  # one Newton step
        probs = e * r
    else:
        probs = x

    if alpha != 0.0:                                           # alpha=0 -> identity
        probs = ((1.0 - probs) ** alpha) * probs

    if ragged:
        probs = probs * valid.astype(jnp.float32)              # padded cols add no mass

    cls = jax.lax.broadcasted_iota(jnp.int32, (c, tn), 0)
    onehot = (t == cls).astype(jnp.float32)                    # (C, TILE)

    if not square_denominator:
        i_ck = jnp.sum(probs * onehot, axis=1, keepdims=True)  # (C, 1)
        p_ck = jnp.sum(probs, axis=1, keepdims=True)           # (C, 1)
        y_ck = jnp.sum(onehot, axis=1, keepdims=True)          # (C, 1)
    else:
        # Per-element denominator (matches the module's torch.sum(..., -1) on
        # the (N,1) view).  y in {0,1} so y**2 == y.
        term = (2.0 * probs * onehot + smooth) / (probs * probs + onehot + smooth)
        if ragged:
            term = term * valid.astype(jnp.float32)            # padded term would be 1
        i_ck = jnp.sum(term, axis=1, keepdims=True)
        p_ck = jnp.zeros((c, 1), jnp.float32)
        y_ck = jnp.zeros((c, 1), jnp.float32)

    # Pack the three (C,1) sums into one (C,3) block -> single store / single
    # output writeback DMA per grid step (built with broadcasted selects; no
    # concat relayout).
    slot = jax.lax.broadcasted_iota(jnp.int32, (1, 3), 1)
    out_ref[0] = jnp.where(slot == 0, i_ck, jnp.where(slot == 1, p_ck, y_ck))


def _pick_tile(n, tile_n):
    """Choose (tile_rows, num_tiles).

    tile_rows is a multiple of 128 whenever more than one tile is used
    (BlockSpec lane-divisibility); a single full-extent block otherwise.
    Prefers an even number of tiles so the 'parallel' grid axis can be split
    evenly across v7x's two TensorCores (best effort)."""
    chunks = -(-n // 128)                   # number of 128-row chunks
    if chunks <= 1:
        return n, 1                         # single full-extent block
    max_chunks = max(tile_n // 128, 1)
    cpt = min(chunks, max_chunks)           # 128-row chunks per tile
    nt = -(-chunks // cpt)
    if nt % 2 == 1 and nt + 1 <= chunks:    # prefer an even grid
        cpt = -(-chunks // (nt + 1))
        nt = -(-chunks // cpt)
    tile = 128 * cpt
    return tile, -(-n // tile)


def dice_loss(logits, target, *, smooth=1e-4, alpha=0.0,
              square_denominator=False, with_logits=True,
              reduction="mean", tile_n=131072, class_major=False,
              vmem_limit_bytes=48 * 1024 * 1024):
    """Multi-class DiceLoss forward (index_label_position=True, mask=None,
    ohem_ratio=0).  reduction in {'mean', 'sum'}.

    class_major=True: `logits` is already (C, N) (producer emits class-major),
    which avoids the wrapper transpose entirely."""
    # TODO(synk): ohem_ratio>0 (data-dependent sort / masked_select), the
    # binary-class (logits_size==1) branch, the optional `mask` argument,
    # reduction='none', and index_label_position=False are not implemented.
    if class_major:
        c, n = logits.shape
        logits_t = logits                          # no transpose needed
    else:
        n, c = logits.shape
        logits_t = jnp.transpose(logits)           # one extra HBM pass; see header
    target2d = target.reshape(1, n)                # keep producer dtype (int8 ok)

    tile, nt = _pick_tile(n, tile_n)
    ragged = (n % tile) != 0

    kernel = functools.partial(
        _dice_partial_kernel, smooth=float(smooth), alpha=float(alpha),
        square_denominator=bool(square_denominator),
        with_logits=bool(with_logits), n_total=n, tile_rows=tile,
        ragged=ragged)

    parts = pl.pallas_call(
        kernel,
        out_shape=jax.ShapeDtypeStruct((nt, c, 3), jnp.float32),
        grid_spec=pltpu.PrefetchScalarGridSpec(
            num_scalar_prefetch=0,
            grid=(nt,),
            in_specs=[
                pl.BlockSpec((c, tile), lambda i: (0, i)),
                pl.BlockSpec((1, tile), lambda i: (0, i)),
            ],
            out_specs=pl.BlockSpec((1, c, 3), lambda i: (i, 0, 0)),
        ),
        compiler_params=pltpu.CompilerParams(
            dimension_semantics=("parallel",),
            vmem_limit_bytes=int(vmem_limit_bytes)),
    )(logits_t, target2d)

    # Tiny O(nt*C) epilogue: combine partial sums algebraically.
    sums = jnp.sum(parts, axis=0)                  # (C, 3)
    i_c, p_c, y_c = sums[:, 0], sums[:, 1], sums[:, 2]
    if not square_denominator:
        ratio = (2.0 * i_c + n * smooth) / (p_c + y_c + smooth)
    else:
        ratio = i_c
    loss_sum = n * c - jnp.sum(ratio)              # == sum_i loss_i
    if reduction == "mean":
        return loss_sum / n
    if reduction == "sum":
        return loss_sum
    raise NotImplementedError("reduction='none' is not supported by this kernel")


def dice_loss_ref(logits, target, *, smooth=1e-4):
    """Pure-JAX reference matching the PyTorch module with default args."""
    n, c = logits.shape
    probs = jax.nn.softmax(logits.astype(jnp.float32), axis=1)
    onehot = jax.nn.one_hot(target, c, dtype=jnp.float32)
    loss = jnp.zeros((n,), jnp.float32)
    for label_idx in range(c):
        p = probs[:, label_idx]
        y = onehot[:, label_idx]
        inter = p * y
        loss_c = 1.0 - (2.0 * inter + smooth) / (p.sum() + y.sum() + smooth)
        loss = loss + loss_c
    return loss.mean()


if __name__ == "__main__":
    key = jax.random.PRNGKey(0)
    k1, k2, k3 = jax.random.split(key, 3)
    N, C = 256, 8
    logits = jax.random.normal(k1, (N, C), dtype=jnp.float32)
    target = jax.random.randint(k2, (N,), 0, C, dtype=jnp.int32)

    # Standard (N, C) path -- tile picker gives tile=128, nt=2 (even grid).
    out = jax.block_until_ready(dice_loss(logits, target))
    ref = dice_loss_ref(logits, target)
    assert abs(float(out) - float(ref)) < 1e-4, (float(out), float(ref))

    # Ragged N (exercises the in-kernel validity mask on the last tile).
    N2 = 200
    logits2 = jax.random.normal(k3, (N2, C), dtype=jnp.float32)
    target2 = jax.random.randint(k2, (N2,), 0, C, dtype=jnp.int32)
    out2 = jax.block_until_ready(dice_loss(logits2, target2))
    ref2 = dice_loss_ref(logits2, target2)
    assert abs(float(out2) - float(ref2)) < 1e-4, (float(out2), float(ref2))

    # Producer-supplied class-major logits (no wrapper transpose).
    out3 = jax.block_until_ready(
        dice_loss(jnp.transpose(logits), target, class_major=True))
    assert abs(float(out3) - float(ref)) < 1e-4, (float(out3), float(ref))

    print("KERNEL_OK")
</pallas_src>

<mosaic_0001>
module attributes {stable_mosaic.version = 11 : i64} {
  func.func @_dice_partial_kernel(%arg0: i32, %arg1: memref<8x128xf32, #tpu.memory_space<vmem>>, %arg2: memref<1x128xi32, #tpu.memory_space<vmem>>, %arg3: memref<1x8x3xf32, #tpu.memory_space<vmem>>) attributes {dimension_semantics = [#tpu.dimension_semantics<parallel>], iteration_bounds = array<i64: 2>, scalar_prefetch = 0 : i64, scratch_operands = 0 : i64, tpu.core_type = #tpu.core_type<tc>, window_params = [{transform_indices = @transform_0, window_bounds = array<i64: 8, 128>}, {transform_indices = @transform_1, window_bounds = array<i64: 1, 128>}, {transform_indices = @transform_2, window_bounds = array<i64: 1, 8, 3>}]} {
    %c0 = arith.constant 0 : index
    %c0_0 = arith.constant 0 : index
    %0 = vector.load %arg1[%c0, %c0_0] : memref<8x128xf32, #tpu.memory_space<vmem>>, vector<8x128xf32>
    %c0_1 = arith.constant 0 : index
    %c0_2 = arith.constant 0 : index
    %1 = vector.load %arg2[%c0_1, %c0_2] : memref<1x128xi32, #tpu.memory_space<vmem>>, vector<1x128xi32>
    %cst = arith.constant dense<0xFF800000> : vector<128xf32>
    %2 = vector.multi_reduction <maximumf>, %0, %cst [0] : vector<8x128xf32> to vector<128xf32>
    %3 = vector.shape_cast %2 : vector<128xf32> to vector<1x128xf32>
    %4 = vector.broadcast %3 : vector<1x128xf32> to vector<8x128xf32>
    %5 = arith.subf %0, %4 : vector<8x128xf32>
    %6 = math.exp %5 : vector<8x128xf32>
    %cst_3 = arith.constant dense<0.000000e+00> : vector<128xf32>
    %7 = vector.multi_reduction <add>, %6, %cst_3 [0] : vector<8x128xf32> to vector<128xf32>
    %8 = vector.shape_cast %7 : vector<128xf32> to vector<1x128xf32>
    %9 = tpu.reciprocal %8 {approx = true} : vector<1x128xf32> -> vector<1x128xf32>
    %10 = arith.mulf %8, %9 : vector<1x128xf32>
    %cst_4 = arith.constant 2.000000e+00 : f32
    %11 = vector.broadcast %cst_4 : f32 to vector<1x128xf32>
    %12 = arith.subf %11, %10 : vector<1x128xf32>
    %13 = arith.mulf %9, %12 : vector<1x128xf32>
    %14 = vector.broadcast %13 : vector<1x128xf32> to vector<8x128xf32>
    %15 = arith.mulf %6, %14 : vector<8x128xf32>
    %16 = tpu.iota {dimensions = array<i32: 0>} : vector<8x128xi32>
    %17 = vector.broadcast %1 : vector<1x128xi32> to vector<8x128xi32>
    %18 = arith.cmpi eq, %17, %16 : vector<8x128xi32>
    %19 = arith.extui %18 : vector<8x128xi1> to vector<8x128xi32>
    %20 = arith.sitofp %19 : vector<8x128xi32> to vector<8x128xf32>
    %21 = arith.mulf %15, %20 : vector<8x128xf32>
    %cst_5 = arith.constant dense<0.000000e+00> : vector<8xf32>
    %22 = vector.multi_reduction <add>, %21, %cst_5 [1] : vector<8x128xf32> to vector<8xf32>
    %23 = vector.shape_cast %22 : vector<8xf32> to vector<8x1xf32>
    %cst_6 = arith.constant dense<0.000000e+00> : vector<8xf32>
    %24 = vector.multi_reduction <add>, %15, %cst_6 [1] : vector<8x128xf32> to vector<8xf32>
    %25 = vector.shape_cast %24 : vector<8xf32> to vector<8x1xf32>
    %cst_7 = arith.constant dense<0.000000e+00> : vector<8xf32>
    %26 = vector.multi_reduction <add>, %20, %cst_7 [1] : vector<8x128xf32> to vector<8xf32>
    %27 = vector.shape_cast %26 : vector<8xf32> to vector<8x1xf32>
    %28 = tpu.iota {dimensions = array<i32: 1>} : vector<1x3xi32>
    %c0_i32 = arith.constant 0 : i32
    %29 = vector.broadcast %c0_i32 : i32 to vector<1x3xi32>
    %30 = arith.cmpi eq, %28, %29 : vector<1x3xi32>
    %c1_i32 = arith.constant 1 : i32
    %31 = vector.broadcast %c1_i32 : i32 to vector<1x3xi32>
    %32 = arith.cmpi eq, %28, %31 : vector<1x3xi32>
    %33 = vector.shape_cast %32 : vector<1x3xi1> to vector<1x3xi1>
    %34 = vector.broadcast %33 : vector<1x3xi1> to vector<8x3xi1>
    %35 = vector.shape_cast %25 : vector<8x1xf32> to vector<8x1xf32>
    %36 = vector.broadcast %35 : vector<8x1xf32> to vector<8x3xf32>
    %37 = vector.shape_cast %27 : vector<8x1xf32> to vector<8x1xf32>
    %38 = vector.broadcast %37 : vector<8x1xf32> to vector<8x3xf32>
    %39 = arith.select %34, %36, %38 : vector<8x3xi1>, vector<8x3xf32>
    %40 = vector.shape_cast %30 : vector<1x3xi1> to vector<1x3xi1>
    %41 = vector.broadcast %40 : vector<1x3xi1> to vector<8x3xi1>
    %42 = vector.shape_cast %23 : vector<8x1xf32> to vector<8x1xf32>
    %43 = vector.broadcast %42 : vector<8x1xf32> to vector<8x3xf32>
    %44 = arith.select %41, %43, %39 : vector<8x3xi1>, vector<8x3xf32>
    %c0_8 = arith.constant 0 : index
    %c0_9 = arith.constant 0 : index
    %c0_10 = arith.constant 0 : index
    %45 = vector.load %arg3[%c0_8, %c0_9, %c0_10] : memref<1x8x3xf32, #tpu.memory_space<vmem>>, vector<1x8x3xf32>
    %46 = vector.shape_cast %45 : vector<1x8x3xf32> to vector<8x3xf32>
    %47 = vector.shape_cast %44 : vector<8x3xf32> to vector<1x8x3xf32>
    tpu.vector_store %arg3[%c0_8, %c0_9, %c0_10], %47 {strides = array<i32>} : memref<1x8x3xf32, #tpu.memory_space<vmem>>, vector<1x8x3xf32>,
    return
  }
  func.func @transform_0(%arg0: i32) -> (i32, i32) {
    %c0_i32 = arith.constant 0 : i32
    %c0_i32_0 = arith.constant 0 : i32
    return %c0_i32, %arg0 : i32, i32
  }
  func.func @transform_1(%arg0: i32) -> (i32, i32) {
    %c0_i32 = arith.constant 0 : i32
    %c0_i32_0 = arith.constant 0 : i32
    return %c0_i32, %arg0 : i32, i32
  }
  func.func @transform_2(%arg0: i32) -> (i32, i32, i32) {
    %c0_i32 = arith.constant 0 : i32
    %c0_i32_0 = arith.constant 0 : i32
    %c0_i32_1 = arith.constant 0 : i32
    return %arg0, %c0_i32, %c0_i32_0 : i32, i32, i32
  }
}

</mosaic_0001>

<llo_original>
// kernel: tpu_custom_call.1
$region0: #{tpu_custom_call.1}
  #allocation0 [shape = 'u32[]', space=smem, size = 0x4, offset = 0x4, fixed_abs, tag = 'smem constant byte address 0x4 - core index']
  #allocation1 [shape = 'u32[144,128]{1,0:T(1,128)}', space=vmem, size = 0x12000, scoped, tag = 'internal scratch']
  %s0 = inlined_call_operand.hbm [shape: f32[8,256], index: 0, kind: input, shape index: {}]
  %s1 = inlined_call_operand.vmem [shape: s32[1,256], index: 1, kind: input, shape index: {}]
  %s2 = inlined_call_operand.vmem [shape: f32[2,8,3], index: 2, kind: output, shape index: {}]
  %s3 = sld [smem:[#allocation0]]
  $region45: #{tpu_custom_call.1} parent=0
    _
  %s5 = ssub.s32 1, %s3
  %s6 = scalar_select 0, %s5, %s3
  $region1: #{tpu_custom_call.1} parent=0
    #allocation2 [shape = 'u8[8192]{0}', space=vmem, size = 0x2000, scoped, tag = 'input window, operand 0']
    #allocation3 [shape = 's32[2]{0}', space=sflag, size = 0x8, scoped, tag = 'scoped memory for tpu_custom_call.1']
    %7 = vsyncpa [#allocation3], 0
    %s8 = scalar_lea.sflag [#allocation3], 1
    %9 = vsyncpa %s8, 0
    loop: start=0, step=1, limit=4
    $region2: #{tpu_custom_call.1} parent=1 // loop_pre_header
      _
    $region3: #{tpu_custom_call.1} parent=1 // loop_header
      %s11 = sphi 0, %s15
      %p12 = scmp.ge.s32.totalorder %s11, 4
      %s21 = sphi 0, %s23
      %s24 = sphi 0, %s21
      %s25 = sphi 0, %s24
      %s41 = sphi 0, %s25
      %s47 = sphi 0, %s49
      %s50 = sphi 0, %s47
      %s51 = sphi 0, %s50
      %s67 = sphi 0, %s51
      %s73 = sphi 0, %s75
      %s76 = sphi 0, %s73
      %s77 = sphi 0, %s76
      %s93 = sphi 0, %s77
    $region4: #{tpu_custom_call.1} parent=1 // loop_header_branch
      %14 = sbr.rel (%p12) target = $region8
    $region5: #{tpu_custom_call.1} parent=1 // loop_body
      %s16 = ssub.s32 %s11, 1
      %s17 = ssub.s32 %s11, 2
      %s18 = sadd.s32 %s11, 1
      %s19 = ssub.s32 %s11, %s18
      %p20 = scmp.eq.s32.totalorder %s19, 0
      %s22 = sadd.s32 %s21, 1
      %s23 = scalar_select %p20, %s21, %s22
      %p26 = pneg %p20
      %p27 = scmp.eq.s32.totalorder %s11, 1
      %p28 = por %p26, %p27
      %p29 = scmp.ne.s32.totalorder %s21, %s24
      %p30 = scmp.eq.s32.totalorder %s11, 0
      %p31 = por %p29, %p30
      %p32 = scmp.ne.s32.totalorder %s21, %s24
      %p33 = scmp.eq.s32.totalorder %s16, 1
      %p34 = por %p32, %p33
      %p35 = scmp.ne.s32.totalorder %s24, %s25
      %p36 = scmp.eq.s32.totalorder %s16, 0
      %p37 = por %p35, %p36
      %p38 = scmp.ne.s32.totalorder %s24, %s25
      %p39 = scmp.eq.s32.totalorder %s17, 1
      %p40 = por %p38, %p39
      %p42 = scmp.ne.s32.totalorder %s25, %s41
      %p43 = scmp.eq.s32.totalorder %s17, 0
      %p44 = por %p42, %p43
      %s45 = ssub.s32 %s11, %s18
      %p46 = scmp.eq.s32.totalorder %s45, 0
      %s48 = sadd.s32 %s47, 1
      %s49 = scalar_select %p46, %s47, %s48
      %p52 = pneg %p46
      %p53 = scmp.eq.s32.totalorder %s11, 1
      %p54 = por %p52, %p53
      %p55 = scmp.ne.s32.totalorder %s47, %s50
      %p56 = scmp.eq.s32.totalorder %s11, 0
      %p57 = por %p55, %p56
      %p58 = scmp.ne.s32.totalorder %s47, %s50
      %p59 = scmp.eq.s32.totalorder %s16, 1
      %p60 = por %p58, %p59
      %p61 = scmp.ne.s32.totalorder %s50, %s51
      %p62 = scmp.eq.s32.totalorder %s16, 0
      %p63 = por %p61, %p62
      %p64 = scmp.ne.s32.totalorder %s50, %s51
      %p65 = scmp.eq.s32.totalorder %s17, 1
      %p66 = por %p64, %p65
      %p68 = scmp.ne.s32.totalorder %s51, %s67
      %p69 = scmp.eq.s32.totalorder %s17, 0
      %p70 = por %p68, %p69
      %s71 = ssub.s32 %s11, %s18
      %p72 = scmp.eq.s32.totalorder %s71, 0
      %s74 = sadd.s32 %s73, 1
      %s75 = scalar_select %p72, %s73, %s74
      %p78 = pneg %p72
      %p79 = scmp.eq.s32.totalorder %s11, 1
      %p80 = por %p78, %p79
      %p81 = scmp.ne.s32.totalorder %s73, %s76
      %p82 = scmp.eq.s32.totalorder %s11, 0
      %p83 = por %p81, %p82
      %p84 = scmp.ne.s32.totalorder %s73, %s76
      %p85 = scmp.eq.s32.totalorder %s16, 1
      %p86 = por %p84, %p85
      %p87 = scmp.ne.s32.totalorder %s76, %s77
      %p88 = scmp.eq.s32.totalorder %s16, 0
      %p89 = por %p87, %p88
      %p90 = scmp.ne.s32.totalorder %s76, %s77
      %p91 = scmp.eq.s32.totalorder %s17, 1
      %p92 = por %p90, %p91
      %p94 = scmp.ne.s32.totalorder %s77, %s93
      %p95 = scmp.eq.s32.totalorder %s17, 0
      %p96 = por %p94, %p95
      %p97 = scmp.le.s32.totalorder 1, %s11
      %p98 = scmp.lt.s32.totalorder %s11, 3
      %p99 = pnand %p97, %p98
      %p100 = pneg %p99
      // Predicated region
      $region9: #{tpu_custom_call.1} parent=5 // pred_check
        _
      $region10: #{tpu_custom_call.1} parent=5 // pred_check_branch
        %102 = sbr.rel (%p99) target = $region12
      $region11: #{tpu_custom_call.1} parent=5 // pred_region
        %s103 = ssub.s32 %s11, 1
      $region12: #{tpu_custom_call.1} parent=5 // pred_fallthru
        _
      %p104 = scmp.lt.s32.totalorder %s11, 2
      // Predicated region
      $region13: #{tpu_custom_call.1} parent=5 // pred_check
        %p105 = pneg %p104
      $region14: #{tpu_custom_call.1} parent=5 // pred_check_branch
        %107 = sbr.rel (%p105) target = $region16
      $region15: #{tpu_custom_call.1} parent=5 // pred_region
        // Predicated region
        $region17: #{tpu_custom_call.1} parent=15 // pred_check
          %p108 = pneg %p31
        $region18: #{tpu_custom_call.1} parent=15 // pred_check_branch
          %110 = sbr.rel (%p108) target = $region20
        $region19: #{tpu_custom_call.1} parent=15 // pred_region
          %s111 = sand.u32 %s21, 1
          %s112 = scalar_lea.sflag [#allocation3], %s111
          %s113 = sand.u32 %s21, 1
          %s114 = smul.addr %s113, 8
          %s115 = scalar_lea.vmem [#allocation2], %s114
          %s117 = ssub.s32 128, 128
          %118 = vsyncadd %s112, %s117
          %s119 = smul.addr %s11, 128
          %s120 = scalar_lea.hbm %s0, %s119
          %s122 = sshll.u32 %s115, 4
          %s123 = int_to_ptr.vmem [resolvable:$true] %s122
          %125 = dma.hbm_to_vmem [thread:$0]  %s120, 128, %s123, %s112
        $region20: #{tpu_custom_call.1} parent=15 // pred_fallthru
          _
        // Predicated region
        $region21: #{tpu_custom_call.1} parent=15 // pred_check
          %p126 = pneg %p57
        $region22: #{tpu_custom_call.1} parent=15 // pred_check_branch
          %128 = sbr.rel (%p126) target = $region24
        $region23: #{tpu_custom_call.1} parent=15 // pred_region
          %p129 = scmp.lt.s32.totalorder %s11, 1
          %s130 = scalar_select %p129, %s11, 1
          %s131 = scalar_lea.vmem %s1, %s130
        $region24: #{tpu_custom_call.1} parent=15 // pred_fallthru
          _
      $region16: #{tpu_custom_call.1} parent=5 // pred_fallthru
        _
      %p132 = scmp.le.s32.totalorder 1, %s11
      %p133 = scmp.lt.s32.totalorder %s11, 3
      %p134 = pnand %p132, %p133
      %p135 = pneg %p134
      // Predicated region
      $region25: #{tpu_custom_call.1} parent=5 // pred_check
        _
      $region26: #{tpu_custom_call.1} parent=5 // pred_check_branch
        %137 = sbr.rel (%p134) target = $region28
      $region27: #{tpu_custom_call.1} parent=5 // pred_region
        %s138 = ssub.s32 %s11, 1
        %s139 = sand.u32 %s24, 1
        %s140 = scalar_lea.sflag [#allocation3], %s139
        %s141 = sand.u32 %s24, 1
        %s142 = smul.addr %s141, 8
        %s143 = scalar_lea.vmem [#allocation2], %s142
        // Predicated region
        $region29: #{tpu_custom_call.1} parent=27 // pred_check
          %p144 = pneg %p37
        $region30: #{tpu_custom_call.1} parent=27 // pred_check_branch
          %146 = sbr.rel (%p144) target = $region32
        $region31: #{tpu_custom_call.1} parent=27 // pred_region
          %147 = dma.done %s140, 128
        $region32: #{tpu_custom_call.1} parent=27 // pred_fallthru
          _
        %s148 = sand.u32 %s24, 1
        %s149 = scalar_lea.sflag [#allocation3], %s148
        %s150 = sand.u32 %s24, 1
        %s151 = smul.addr %s150, 8
        %s152 = scalar_lea.vmem [#allocation2], %s151
        %p153 = pneg %p37
        %p154 = pneg %p34
        %p155 = scmp.lt.s32.totalorder %s16, 1
        %s156 = scalar_select %p155, %s16, 1
        %s157 = scalar_lea.vmem %s1, %s156
        %p158 = pneg %p63
        %p159 = pneg %p60
        %p160 = pneg %p89
        %p161 = pneg %p86
        %p162 = scmp.lt.s32.totalorder %s16, 1
        %s163 = scalar_select %p162, %s16, 1
        %s164 = smul.addr %s163, 8
        %s165 = scalar_lea.vmem %s2, %s164
        %p166 = scmp.lt.s32.totalorder %s16, 1
        %s167 = scalar_select %p166, %s16, 1
        %s168 = scalar_lea.vmem %s1, %s167
        %p169 = scmp.lt.s32.totalorder %s16, 1
        %s170 = scalar_select %p169, %s16, 1
        %s171 = smul.addr %s170, 8
        %s172 = scalar_lea.vmem %s2, %s171
        %v173 = vld [vmem:[%s143] sm:$0xff]
        %v174 = vld [vmem:[%s168] sm:$0x1]
        %v175 = vrot.slane %v173, 4
        %v176 = vmax.f32 %v173, %v175
        %v177 = vrot.slane %v176, 2
        %v178 = vmax.f32 %v176, %v177
        %v179 = vrot.slane %v178, 1
        %v180 = vmax.f32 %v178, %v179
        %v181 = vsub.f32 %v173, %v180
        %v182 = vmul.f32 %v181, 1.442695
        %v183 = vpow.pop %v182
        %v184 = vrot.slane %v183, 4
        %v185 = vadd.f32 %v183, %v184
        %v186 = vrot.slane %v185, 2
        %v187 = vadd.f32 %v185, %v186
        %v188 = vrot.slane %v187, 1
        %v189 = vadd.f32 %v187, %v188
        %v190 = vrcp.pop %v189
        %v191 = vmul.f32 %v189, %v190
        %v192 = vsub.f32 2.0, %v191
        %v193 = vmul.f32 %v190, %v192
        %v194 = vmul.f32 %v183, %v193
        %v195 = vlaneseq
        %v196 = vshrl.u32 %v195, 7
        %v197 = vlaneseq
        %v198 = vshrl.u32 %v197, 7
        %v199 = vsub.s32 0, %v198
        %v200 = vrot.slane %v174, %v199
        %vm201 = vcmp.eq.s32.totalorder %v200, %v196
        %v202 = vsel %vm201, 1, 0
        %v203 = vcvt.s32.f32 %v202
        %v204 = vmul.f32 %v194, %v203
        %205 = vadd.xlane.f32.xlu0 %v204
        %v206 = vpop.xlane.xlu0 %205
        %207 = vadd.xlane.f32.xlu0 %v194
        %v208 = vpop.xlane.xlu0 %207
        %209 = vadd.xlane.f32.xlu0 %v203
        %v210 = vpop.xlane.xlu0 %209
        %v211 = vlaneseq
        %v212 = vand.u32 %v211, 127
        %vm213 = vcmp.eq.s32.totalorder %v212, 0
        %vm214 = vcmp.eq.s32.totalorder %v212, 1
        %v215 = vsel %vm214, 1, 0
        %vm216 = vcmp.eq.s32.totalorder %v215, 1
        %v217 = vsel %vm216, %v208, %v210
        %v218 = vsel %vm213, 1, 0
        %vm219 = vcmp.eq.s32.totalorder %v218, 1
        %v220 = vsel %vm219, %v206, %v217
        %vm221 = vcmask 23552
        %222 = vst.msk [vmem:[%s172] sm:$0xff] %vm221, %v220
        %p223 = scmp.lt.s32.totalorder %s16, 1
        %s224 = scalar_select %p223, %s16, 1
        %s225 = smul.addr %s224, 8
        %s226 = scalar_lea.vmem %s2, %s225
        // Predicated region
        $region33: #{tpu_custom_call.1} parent=27 // pred_check
          %p227 = pneg %p86
        $region34: #{tpu_custom_call.1} parent=27 // pred_check_branch
          %229 = sbr.rel (%p227) target = $region36
        $region35: #{tpu_custom_call.1} parent=27 // pred_region
          _
        $region36: #{tpu_custom_call.1} parent=27 // pred_fallthru
          _
      $region28: #{tpu_custom_call.1} parent=5 // pred_fallthru
        _
      %p230 = scmp.le.s32.totalorder 2, %s11
      // Predicated region
      $region37: #{tpu_custom_call.1} parent=5 // pred_check
        %p231 = pneg %p230
      $region38: #{tpu_custom_call.1} parent=5 // pred_check_branch
        %233 = sbr.rel (%p231) target = $region40
      $region39: #{tpu_custom_call.1} parent=5 // pred_region
        %s234 = ssub.s32 %s11, 2
        // Predicated region
        $region41: #{tpu_custom_call.1} parent=39 // pred_check
          %p235 = pneg %p92
        $region42: #{tpu_custom_call.1} parent=39 // pred_check_branch
          %237 = sbr.rel (%p235) target = $region44
        $region43: #{tpu_custom_call.1} parent=39 // pred_region
          %p238 = scmp.lt.s32.totalorder %s17, 1
          %s239 = scalar_select %p238, %s17, 1
          %s240 = smul.addr %s239, 8
          %s241 = scalar_lea.vmem %s2, %s240
        $region44: #{tpu_custom_call.1} parent=39 // pred_fallthru
          _
      $region40: #{tpu_custom_call.1} parent=5 // pred_fallthru
        _
    $region6: #{tpu_custom_call.1} parent=1 // loop_footer
      %s15 = sadd.s32 1, %s11
    $region7: #{tpu_custom_call.1} parent=1 // loop_footer_branch
      %10 = sbr.rel target = $region3
    $region8: #{tpu_custom_call.1} parent=1 // loop_exit
      _
    %242 = vsyncpa [#allocation3], 1
    %s243 = scalar_lea.sflag [#allocation3], 1
    %244 = vsyncpa %s243, 1

</llo_original>
